<compile_context>
chip_gen: v5e
topology: v5e:2x2
jax: 0.10.0
libtpu: 0.0.40
codegen_flags: <defaults>
</compile_context>

<pallas_src>
import functools

import jax
import jax.numpy as jnp
from jax import lax
from jax.experimental import pallas as pl
from jax.experimental.pallas import tpu as pltpu

LANE = 128            # lane width: tiny class dim is padded to a lane-dense slab
SUBLANE = 8
NEG_INF = -1e30       # bias value for padded class lanes (never wins max/softmax)
EPS = 1e-8            # guards rsqrt norms and the (row_sum - pos) denominator
T_NTXENT = 0.5
INV_T = 1.0 / T_NTXENT

_VMEM_LIMIT = 32 * 1024 * 1024   # explicit scoped-VMEM budget; safe on v5e/v6e/v7x


def _round_up(x, m):
    return ((x + m - 1) // m) * m


def _pad_rows(x, rows):
    if x.shape[0] == rows:
        return x
    return jnp.pad(x, ((0, rows - x.shape[0]),) + ((0, 0),) * (x.ndim - 1))


def _tile_b(b):
    # Whole batch as one tile up to 512 rows (per-grid-step overhead dominates the tiny
    # K=N~32 matmuls); 512-row tiles beyond that.  512 is bf16-sublane (16) aligned, and
    # any single-tile case equals the full (padded) array so layout rules are satisfied.
    return min(512, _round_up(max(b, SUBLANE), SUBLANE))


def _ntxent_row_tile(b, cols):
    # Row tile for the [tq, cols] similarity slab: keep ~4 live f32 copies within a third
    # of the scoped VMEM budget (rest: double-buffered inputs + the resident view-2 operand).
    by_vmem = (_VMEM_LIMIT // 3) // (4 * 4 * cols)
    by_vmem = max(16, (by_vmem // 16) * 16)          # bf16-sublane (16) aligned
    return min(512, _round_up(max(b, SUBLANE), SUBLANE), by_vmem)


# ----------------------------------------------------------------------------
# Kernel 1: MLPClassifier forward, fused with nll gather / argmax / accuracy.
#   Linear -> ReLU -> Linear -> log_softmax ; per-row (nll, acc) in one stream.
# ----------------------------------------------------------------------------
def _clf_kernel(x_ref, y_ref, w1_ref, b1_ref, w2_ref, b2_ref, logp_ref, stats_ref):
    x = x_ref[...]                                                     # bf16 [TB, D]
    h = jnp.dot(x, w1_ref[...], preferred_element_type=jnp.float32) + b1_ref[...]
    h = jnp.maximum(h, 0.0)
    logits = jnp.dot(h.astype(jnp.bfloat16), w2_ref[...],
                     preferred_element_type=jnp.float32) + b2_ref[...]  # [TB, CP] f32
    # padded class lanes carry NEG_INF in b2 -> excluded from softmax / argmax for free
    m = jnp.max(logits, axis=1, keepdims=True)
    s = logits - m
    lse = jnp.log(jnp.sum(jnp.exp(s), axis=1, keepdims=True))
    logp = s - lse                                                      # f32
    logp_ref[...] = logp.astype(logp_ref.dtype)                         # bf16, lane-dense

    # nll gather / argmax / accuracy on the already-resident tile (f32 logp)
    y = y_ref[...]                                                      # [TB, 1] int32
    cp = logp.shape[1]
    ci = lax.broadcasted_iota(jnp.int32, logp.shape, 1)
    nll_row = -jnp.sum(jnp.where(ci == y, logp, 0.0), axis=1, keepdims=True)
    # argmax tie-break: lowest index of the f32 maximum (PyTorch may differ on exact ties)
    pred = jnp.min(jnp.where(logits == m, ci, cp), axis=1, keepdims=True)
    acc_row = (pred == y).astype(jnp.float32)
    # single narrow output stream: lane 0 = per-row nll, lane 1 = per-row accuracy
    li = lax.broadcasted_iota(jnp.int32, (logp.shape[0], 2), 1)
    stats_ref[...] = jnp.where(li == 0, nll_row, acc_row)


def mlp_classifier_fwd(x, labels, w1, b1, w2_pad, b2_pad):
    B, D = x.shape
    H = w1.shape[1]
    CP = w2_pad.shape[1]
    tb = _tile_b(B)
    bp = _round_up(B, tb)
    xp = _pad_rows(x, bp).astype(jnp.bfloat16)       # bf16 activation stream (half DMA)
    yp = _pad_rows(labels.reshape(-1, 1).astype(jnp.int32), bp)

    row = lambda i: (i, 0)
    rep = lambda i: (0, 0)   # weights/biases stay VMEM-resident across the batch grid

    return pl.pallas_call(
        _clf_kernel,
        grid=(bp // tb,),
        in_specs=[
            pl.BlockSpec((tb, D), row),
            pl.BlockSpec((tb, 1), row),
            pl.BlockSpec((D, H), rep),
            pl.BlockSpec((1, H), rep),
            pl.BlockSpec((H, CP), rep),
            pl.BlockSpec((1, CP), rep),
        ],
        out_specs=(
            pl.BlockSpec((tb, CP), row),
            pl.BlockSpec((tb, 2), row),
        ),
        out_shape=(
            jax.ShapeDtypeStruct((bp, CP), jnp.bfloat16),   # padded log-probs (bf16)
            jax.ShapeDtypeStruct((bp, 2), jnp.float32),     # [nll, acc] per row
        ),
        compiler_params=pltpu.CompilerParams(
            dimension_semantics=("parallel",),
            vmem_limit_bytes=_VMEM_LIMIT),
    )(xp, yp, w1, b1, w2_pad, b2_pad)


# ----------------------------------------------------------------------------
# Kernel 2: projection_head forward (Linear -> ReLU -> Linear), batch-gridded
# ----------------------------------------------------------------------------
def _proj_kernel(x_ref, w1_ref, b1_ref, w2_ref, b2_ref, o_ref):
    h = jnp.dot(x_ref[...], w1_ref[...], preferred_element_type=jnp.float32) + b1_ref[...]
    h = jnp.maximum(h, 0.0)
    o_ref[...] = jnp.dot(h.astype(jnp.bfloat16), w2_ref[...],
                         preferred_element_type=jnp.float32) + b2_ref[...]


def projection_head_fwd(x, w1, b1, w2, b2):
    B, D = x.shape
    H = w1.shape[1]
    O = w2.shape[1]
    tb = _tile_b(B)
    bp = _round_up(B, tb)
    xp = _pad_rows(x, bp).astype(jnp.bfloat16)
    row = lambda i: (i, 0)
    rep = lambda i: (0, 0)
    out = pl.pallas_call(
        _proj_kernel,
        grid=(bp // tb,),
        in_specs=[
            pl.BlockSpec((tb, D), row),
            pl.BlockSpec((D, H), rep),
            pl.BlockSpec((1, H), rep),
            pl.BlockSpec((H, O), rep),
            pl.BlockSpec((1, O), rep),
        ],
        out_specs=pl.BlockSpec((tb, O), row),
        out_shape=jax.ShapeDtypeStruct((bp, O), jnp.float32),
        compiler_params=pltpu.CompilerParams(
            dimension_semantics=("parallel",),
            vmem_limit_bytes=_VMEM_LIMIT),
    )(xp, w1, b1, w2, b2)
    return out[:B]


# ----------------------------------------------------------------------------
# NT-Xent per-row-tile body (shared by the standalone and fused contrastive kernels)
# ----------------------------------------------------------------------------
def _normalize_bf16(z):
    # row-normalize in f32 (rsqrt on the EUP), cast to bf16 for the MXU similarity matmul
    return (z * lax.rsqrt(jnp.sum(z * z, axis=1, keepdims=True) + EPS)
            ).astype(jnp.bfloat16)


def _nt_xent_tile(z1n, z2n, row_off, b_actual):
    """Partial NT-Xent sum over one row tile. z1n: [tq,D] bf16, z2n: [cols,D] bf16."""
    tq = z1n.shape[0]
    cols = z2n.shape[0]
    # contract dim 1 of both operands -> no materialized transpose of z2n
    sim = jnp.exp(lax.dot_general(
        z1n, z2n, dimension_numbers=(((1,), (1,)), ((), ())),
        preferred_element_type=jnp.float32) * INV_T)                    # [tq, cols] f32
    ci = lax.broadcasted_iota(jnp.int32, (tq, cols), 1)
    ri = lax.broadcasted_iota(jnp.int32, (tq, cols), 0) + row_off       # global row ids
    col_valid = ci < b_actual                   # mask padded columns out of the row sums
    is_diag = jnp.logical_and(ri == ci, col_valid)
    pos = jnp.sum(jnp.where(is_diag, sim, 0.0), axis=1, keepdims=True)
    neg = jnp.sum(jnp.where(jnp.logical_and(col_valid, ri != ci), sim, 0.0),
                  axis=1, keepdims=True)        # = row_sum - pos, guaranteed >= 0
    loss_i = jnp.log(neg + EPS) - jnp.log(pos + EPS)   # = -log(pos / (row_sum - pos))
    row_valid = (lax.broadcasted_iota(jnp.int32, (tq, 1), 0) + row_off) < b_actual
    return jnp.sum(jnp.where(row_valid, loss_i, 0.0))


# ----------------------------------------------------------------------------
# Kernel 3: standalone loss_cl(x1, x2), row-tiled over x1 (API-fidelity path)
# ----------------------------------------------------------------------------
def _loss_cl_kernel(b_actual, tq, x1_ref, x2_ref, part_ref):
    z1n = _normalize_bf16(x1_ref[...].astype(jnp.float32))
    z2n = _normalize_bf16(x2_ref[...].astype(jnp.float32))
    part = _nt_xent_tile(z1n, z2n, pl.program_id(0) * tq, b_actual)
    # per-tile partial sum written as an aligned (8,128) f32 slab (unmasked store,
    # no cross-step accumulator -> batch axis stays "parallel" for v7x megacore)
    part_ref[...] = jnp.full(part_ref.shape, part, jnp.float32)


def loss_cl_fwd(x1, x2):
    B, D = x1.shape
    cols = _round_up(max(B, SUBLANE), LANE)          # lane-dense similarity columns
    tq = _ntxent_row_tile(B, cols)
    bp = _round_up(B, tq)
    x1p = _pad_rows(x1, bp).astype(jnp.bfloat16)
    x2p = _pad_rows(x2, cols).astype(jnp.bfloat16)
    n = bp // tq
    # TODO(synk): for B large enough that the resident view-2 operand (cols*D bf16) itself
    #             outgrows VMEM, the column axis needs a second grid level too.
    part = pl.pallas_call(
        functools.partial(_loss_cl_kernel, B, tq),
        grid=(n,),
        in_specs=[
            pl.BlockSpec((tq, D), lambda i: (i, 0)),
            pl.BlockSpec((cols, D), lambda i: (0, 0)),   # VMEM-resident across the grid
        ],
        out_specs=pl.BlockSpec((1, SUBLANE, LANE), lambda i: (i, 0, 0)),
        out_shape=jax.ShapeDtypeStruct((n, SUBLANE, LANE), jnp.float32),
        compiler_params=pltpu.CompilerParams(
            dimension_semantics=("parallel",),
            vmem_limit_bytes=_VMEM_LIMIT),
    )(x1p, x2p)
    return jnp.sum(part[:, 0, 0]) * (1.0 / B)


# ----------------------------------------------------------------------------
# Kernel 4: fused contrastive path — projection head on both views + NT-Xent,
#           row-tiled over view 1, separate bf16 inputs (no host-side concat).
# ----------------------------------------------------------------------------
def _fused_cl_kernel(b_actual, tq, e1_ref, e2_ref, w1_ref, b1_ref, w2_ref, b2_ref,
                     part_ref):
    def project(e):
        h = jnp.dot(e, w1_ref[...], preferred_element_type=jnp.float32) + b1_ref[...]
        h = jnp.maximum(h, 0.0)
        return jnp.dot(h.astype(jnp.bfloat16), w2_ref[...],
                       preferred_element_type=jnp.float32) + b2_ref[...]

    z1n = _normalize_bf16(project(e1_ref[...]))      # this tile's rows of view 1
    # view 2 is projected per row tile (redundant by ~2*D/tq of the sim-matmul FLOPs)
    z2n = _normalize_bf16(project(e2_ref[...]))
    part = _nt_xent_tile(z1n, z2n, pl.program_id(0) * tq, b_actual)
    part_ref[...] = jnp.full(part_ref.shape, part, jnp.float32)


def forward_cl_loss_fwd(e1, e2, w1, b1, w2, b2):
    B, D = e1.shape
    H = w1.shape[1]
    O = w2.shape[1]
    cols = _round_up(max(B, SUBLANE), LANE)
    tq = _ntxent_row_tile(B, cols)
    bp = _round_up(B, tq)
    e1p = _pad_rows(e1, bp).astype(jnp.bfloat16)     # no host-side f32 concat round-trip
    e2p = _pad_rows(e2, cols).astype(jnp.bfloat16)
    n = bp // tq
    row = lambda i: (i, 0)
    rep = lambda i: (0, 0)
    part = pl.pallas_call(
        functools.partial(_fused_cl_kernel, B, tq),
        grid=(n,),
        in_specs=[
            pl.BlockSpec((tq, D), row),
            pl.BlockSpec((cols, D), rep),
            pl.BlockSpec((D, H), rep),
            pl.BlockSpec((1, H), rep),
            pl.BlockSpec((H, O), rep),
            pl.BlockSpec((1, O), rep),
        ],
        out_specs=pl.BlockSpec((1, SUBLANE, LANE), lambda i: (i, 0, 0)),
        out_shape=jax.ShapeDtypeStruct((n, SUBLANE, LANE), jnp.float32),
        compiler_params=pltpu.CompilerParams(
            dimension_semantics=("parallel",),
            vmem_limit_bytes=_VMEM_LIMIT),
    )(e1p, e2p, w1, b1, w2, b2)
    return jnp.sum(part[:, 0, 0]) * (1.0 / B)


# ----------------------------------------------------------------------------
# GraphClassifier wrapper (parameters initialized deterministically in-script)
# ----------------------------------------------------------------------------
class GraphClassifierPallas:
    def __init__(self, num_class, latent_dim, out_dim, hidden, key):
        if out_dim == 0:
            out_dim = latent_dim
        if hidden <= 0:
            # TODO(synk): MLPClassifier hidden_size==0 path (single Linear) not wired up.
            raise NotImplementedError("hidden must be > 0 in this Pallas port")
        self.num_class = num_class
        self.latent_dim = latent_dim
        ks = jax.random.split(key, 4)

        def lin(k, fan_in, fan_out):
            kw, kb = jax.random.split(k)
            w = 0.1 * jax.random.normal(kw, (fan_in, fan_out), jnp.float32)
            b = 0.1 * jax.random.normal(kb, (1, fan_out), jnp.float32)
            return w, b

        # MLPClassifier: Linear(out_dim, hidden) -> ReLU -> Linear(hidden, num_class)
        h1_w, h1_b = lin(ks[0], out_dim, hidden)
        last_w, last_b = lin(ks[1], hidden, num_class)
        c_pad = _round_up(num_class, LANE)
        # bf16 weights for the MXU; biases stay f32.  Padded class lanes get zero weight
        # columns and a NEG_INF bias so they never influence softmax / argmax.
        self.h1_w = h1_w.astype(jnp.bfloat16)
        self.h1_b = h1_b
        self.last_w = (jnp.zeros((hidden, c_pad), jnp.float32)
                       .at[:, :num_class].set(last_w).astype(jnp.bfloat16))
        self.last_b = (jnp.full((1, c_pad), NEG_INF, jnp.float32)
                       .at[:, :num_class].set(last_b))

        # projection_head: Linear(latent, latent) -> ReLU -> Linear(latent, latent)
        p1_w, p1_b = lin(ks[2], latent_dim, latent_dim)
        p2_w, p2_b = lin(ks[3], latent_dim, latent_dim)
        self.p1_w = p1_w.astype(jnp.bfloat16)
        self.p1_b = p1_b
        self.p2_w = p2_w.astype(jnp.bfloat16)
        self.p2_b = p2_b

    def forward(self, embed, labels=None):
        """embed: [B, out_dim] pooled graph embedding (s2v output)."""
        B = embed.shape[0]
        y = labels if labels is not None else jnp.zeros((B,), jnp.int32)
        logp_pad, stats = mlp_classifier_fwd(
            embed, y, self.h1_w, self.h1_b, self.last_w, self.last_b)
        logits = logp_pad[:B, :self.num_class].astype(jnp.float32)
        if labels is None:
            return logits
        loss = jnp.mean(stats[:B, 0])                  # F.nll_loss (mean reduction)
        acc = stats[:B, 1:2] > 0.5                     # [B,1] bool, pred.eq(y.view_as(pred))
        return logits, loss, acc

    def forward_cl(self, embed):
        """embed: [B, latent_dim] pooled graph embedding (s2v output)."""
        return projection_head_fwd(embed, self.p1_w, self.p1_b, self.p2_w, self.p2_b)

    def loss_cl(self, x1, x2):
        return loss_cl_fwd(x1, x2)

    def forward_cl_loss(self, embed1, embed2):
        """Fused fast path: projection head on both views + NT-Xent loss in one kernel."""
        return forward_cl_loss_fwd(embed1, embed2,
                                   self.p1_w, self.p1_b, self.p2_w, self.p2_b)


if __name__ == "__main__":
    # small deterministic shapes
    B = 2            # batch of graphs
    LATENT = 32      # kwargs['latent_dim']
    OUT_DIM = 32     # kwargs['out_dim']
    HIDDEN = 32      # kwargs['hidden']
    NUM_CLASS = 4    # len(label_map)

    key = jax.random.PRNGKey(0)
    k_params, k_e1, k_e2, k_lbl = jax.random.split(key, 4)
    model = GraphClassifierPallas(NUM_CLASS, LATENT, OUT_DIM, HIDDEN, k_params)

    # stand-in pooled graph embeddings (output of s2v pooling) for two augmented views
    embed1 = jax.random.normal(k_e1, (B, OUT_DIM), jnp.float32)
    embed2 = jax.random.normal(k_e2, (B, LATENT), jnp.float32)
    labels = jax.random.randint(k_lbl, (B,), 0, NUM_CLASS)

    # --- classification path ---
    logits, loss, acc = model.forward(embed1, labels)
    jax.block_until_ready((logits, loss, acc))
    assert logits.shape == (B, NUM_CLASS) and acc.shape == (B, 1)
    # rows sum to 1 in prob space (bf16 logits writeback -> loose tolerance)
    assert jnp.allclose(jnp.sum(jnp.exp(logits), axis=1), 1.0, atol=2e-2)

    # pure-JAX reference with the same bf16 weights / bf16 activations, f32 accumulate
    def ref_clf(x, y):
        h = jnp.dot(x.astype(jnp.bfloat16), model.h1_w,
                    preferred_element_type=jnp.float32) + model.h1_b
        h = jnp.maximum(h, 0.0)
        lg = jnp.dot(h.astype(jnp.bfloat16), model.last_w,
                     preferred_element_type=jnp.float32) + model.last_b
        lp = jax.nn.log_softmax(lg[:, :NUM_CLASS], axis=1)
        l = -jnp.mean(lp[jnp.arange(x.shape[0]), y])
        a = jnp.argmax(lp, axis=1, keepdims=True) == y[:, None]
        return lp, l, a

    ref_lp, ref_loss, ref_acc = ref_clf(embed1, labels)
    assert jnp.allclose(logits, ref_lp, atol=3e-2)               # bf16 writeback rounding
    assert jnp.allclose(loss, ref_loss, atol=1e-4, rtol=1e-4)    # in-kernel nll is f32
    assert bool(jnp.all(acc == ref_acc))

    # --- contrastive path: separate kernels vs fused kernel vs pure-JAX NT-Xent ---
    z1 = model.forward_cl(embed1)
    z2 = model.forward_cl(embed2)
    cl_sep = model.loss_cl(z1, z2)
    cl_fused = model.forward_cl_loss(embed1, embed2)
    jax.block_until_ready((z1, z2, cl_sep, cl_fused))
    assert z1.shape == (B, LATENT) and z2.shape == (B, LATENT)

    def ref_proj(x):
        h = jnp.maximum(jnp.dot(x.astype(jnp.bfloat16), model.p1_w,
                                preferred_element_type=jnp.float32) + model.p1_b, 0.0)
        return jnp.dot(h.astype(jnp.bfloat16), model.p2_w,
                       preferred_element_type=jnp.float32) + model.p2_b

    def ref_loss_cl(x1, x2):
        n1 = jnp.linalg.norm(x1, axis=1)
        n2 = jnp.linalg.norm(x2, axis=1)
        sim = jnp.exp((x1 @ x2.T) / jnp.outer(n1, n2) / T_NTXENT)
        pos = jnp.diagonal(sim)
        return -jnp.mean(jnp.log(pos / (jnp.sum(sim, axis=1) - pos)))

    rz1, rz2 = ref_proj(embed1), ref_proj(embed2)
    assert jnp.allclose(z1, rz1, atol=1e-3, rtol=1e-3)
    assert jnp.allclose(z2, rz2, atol=1e-3, rtol=1e-3)
    ref_cl = ref_loss_cl(rz1, rz2)
    assert jnp.isfinite(cl_sep) and jnp.isfinite(cl_fused)
    assert jnp.allclose(cl_sep, ref_cl, atol=5e-2, rtol=5e-2)    # bf16 sim matmul rounding
    assert jnp.allclose(cl_fused, cl_sep, atol=5e-2, rtol=5e-2)

    print("KERNEL_OK")
</pallas_src>

<mosaic_0001>
module attributes {stable_mosaic.version = 11 : i64} {
  func.func @_clf_kernel(%arg0: i32, %arg1: memref<8x32xbf16, #tpu.memory_space<vmem>>, %arg2: memref<8x1xi32, #tpu.memory_space<vmem>>, %arg3: memref<32x32xbf16, #tpu.memory_space<vmem>>, %arg4: memref<1x32xf32, #tpu.memory_space<vmem>>, %arg5: memref<32x128xbf16, #tpu.memory_space<vmem>>, %arg6: memref<1x128xf32, #tpu.memory_space<vmem>>, %arg7: memref<8x128xbf16, #tpu.memory_space<vmem>>, %arg8: memref<8x2xf32, #tpu.memory_space<vmem>>) attributes {dimension_semantics = [#tpu.dimension_semantics<parallel>], iteration_bounds = array<i64: 1>, scalar_prefetch = 0 : i64, scratch_operands = 0 : i64, tpu.core_type = #tpu.core_type<tc>, window_params = [{transform_indices = @transform_0, window_bounds = array<i64: 8, 32>}, {transform_indices = @transform_1, window_bounds = array<i64: 8, 1>}, {pipeline_mode = #tpu.pipeline_mode<synchronous>, transform_indices = @transform_2, window_bounds = array<i64: 32, 32>}, {pipeline_mode = #tpu.pipeline_mode<synchronous>, transform_indices = @transform_3, window_bounds = array<i64: 1, 32>}, {pipeline_mode = #tpu.pipeline_mode<synchronous>, transform_indices = @transform_4, window_bounds = array<i64: 32, 128>}, {pipeline_mode = #tpu.pipeline_mode<synchronous>, transform_indices = @transform_5, window_bounds = array<i64: 1, 128>}, {transform_indices = @transform_6, window_bounds = array<i64: 8, 128>}, {transform_indices = @transform_7, window_bounds = array<i64: 8, 2>}]} {
    %c0 = arith.constant 0 : index
    %c0_0 = arith.constant 0 : index
    %0 = vector.load %arg1[%c0, %c0_0] : memref<8x32xbf16, #tpu.memory_space<vmem>>, vector<8x32xbf16>
    %c0_1 = arith.constant 0 : index
    %c0_2 = arith.constant 0 : index
    %1 = vector.load %arg3[%c0_1, %c0_2] : memref<32x32xbf16, #tpu.memory_space<vmem>>, vector<32x32xbf16>
    %cst = arith.constant dense<0.000000e+00> : vector<8x32xf32>
    %2 = tpu.matmul %0, %1, %cst {dimension_numbers = #tpu.dot_dimension_numbers<[1], [0], [0], [1], [0, 0, 1, 1], [], []>} : vector<8x32xbf16>, vector<32x32xbf16>, vector<8x32xf32> -> vector<8x32xf32>
    %c0_3 = arith.constant 0 : index
    %c0_4 = arith.constant 0 : index
    %3 = vector.load %arg4[%c0_3, %c0_4] : memref<1x32xf32, #tpu.memory_space<vmem>>, vector<1x32xf32>
    %4 = vector.broadcast %3 : vector<1x32xf32> to vector<8x32xf32>
    %5 = arith.addf %2, %4 : vector<8x32xf32>
    %cst_5 = arith.constant 0.000000e+00 : f32
    %6 = vector.broadcast %cst_5 : f32 to vector<8x32xf32>
    %7 = arith.maximumf %5, %6 : vector<8x32xf32>
    %8 = arith.truncf %7 : vector<8x32xf32> to vector<8x32xbf16>
    %c0_6 = arith.constant 0 : index
    %c0_7 = arith.constant 0 : index
    %9 = vector.load %arg5[%c0_6, %c0_7] : memref<32x128xbf16, #tpu.memory_space<vmem>>, vector<32x128xbf16>
    %cst_8 = arith.constant dense<0.000000e+00> : vector<8x128xf32>
    %10 = tpu.matmul %8, %9, %cst_8 {dimension_numbers = #tpu.dot_dimension_numbers<[1], [0], [0], [1], [0, 0, 1, 1], [], []>} : vector<8x32xbf16>, vector<32x128xbf16>, vector<8x128xf32> -> vector<8x128xf32>
    %c0_9 = arith.constant 0 : index
    %c0_10 = arith.constant 0 : index
    %11 = vector.load %arg6[%c0_9, %c0_10] : memref<1x128xf32, #tpu.memory_space<vmem>>, vector<1x128xf32>
    %12 = vector.broadcast %11 : vector<1x128xf32> to vector<8x128xf32>
    %13 = arith.addf %10, %12 : vector<8x128xf32>
    %cst_11 = arith.constant dense<0xFF800000> : vector<8xf32>
    %14 = vector.multi_reduction <maximumf>, %13, %cst_11 [1] : vector<8x128xf32> to vector<8xf32>
    %15 = vector.shape_cast %14 : vector<8xf32> to vector<8x1xf32>
    %16 = vector.broadcast %15 : vector<8x1xf32> to vector<8x128xf32>
    %17 = arith.subf %13, %16 : vector<8x128xf32>
    %18 = math.exp %17 : vector<8x128xf32>
    %cst_12 = arith.constant dense<0.000000e+00> : vector<8xf32>
    %19 = vector.multi_reduction <add>, %18, %cst_12 [1] : vector<8x128xf32> to vector<8xf32>
    %20 = vector.shape_cast %19 : vector<8xf32> to vector<8x1xf32>
    %21 = math.log %20 : vector<8x1xf32>
    %22 = vector.broadcast %21 : vector<8x1xf32> to vector<8x128xf32>
    %23 = arith.subf %17, %22 : vector<8x128xf32>
    %24 = arith.truncf %23 : vector<8x128xf32> to vector<8x128xbf16>
    %c0_13 = arith.constant 0 : index
    %c0_14 = arith.constant 0 : index
    %25 = vector.load %arg7[%c0_13, %c0_14] : memref<8x128xbf16, #tpu.memory_space<vmem>>, vector<8x128xbf16>
    tpu.vector_store %arg7[%c0_13, %c0_14], %24 {strides = array<i32>} : memref<8x128xbf16, #tpu.memory_space<vmem>>, vector<8x128xbf16>,
    %c0_15 = arith.constant 0 : index
    %c0_16 = arith.constant 0 : index
    %26 = vector.load %arg2[%c0_15, %c0_16] : memref<8x1xi32, #tpu.memory_space<vmem>>, vector<8x1xi32>
    %27 = tpu.iota {dimensions = array<i32: 1>} : vector<8x128xi32>
    %28 = vector.broadcast %26 : vector<8x1xi32> to vector<8x128xi32>
    %29 = arith.cmpi eq, %27, %28 : vector<8x128xi32>
    %cst_17 = arith.constant 0.000000e+00 : f32
    %30 = vector.broadcast %cst_17 : f32 to vector<8x128xf32>
    %31 = arith.select %29, %23, %30 : vector<8x128xi1>, vector<8x128xf32>
    %cst_18 = arith.constant dense<0.000000e+00> : vector<8xf32>
    %32 = vector.multi_reduction <add>, %31, %cst_18 [1] : vector<8x128xf32> to vector<8xf32>
    %33 = vector.shape_cast %32 : vector<8xf32> to vector<8x1xf32>
    %cst_19 = arith.constant 0.000000e+00 : f32
    %34 = vector.broadcast %cst_19 : f32 to vector<8x1xf32>
    %35 = arith.subf %34, %33 : vector<8x1xf32>
    %36 = vector.broadcast %15 : vector<8x1xf32> to vector<8x128xf32>
    %37 = arith.cmpf oeq, %13, %36 : vector<8x128xf32>
    %c128_i32 = arith.constant 128 : i32
    %38 = vector.broadcast %c128_i32 : i32 to vector<8x128xi32>
    %39 = arith.select %37, %27, %38 : vector<8x128xi1>, vector<8x128xi32>
    %cst_20 = arith.constant dense<2147483647> : vector<8xi32>
    %40 = vector.multi_reduction <minsi>, %39, %cst_20 [1] : vector<8x128xi32> to vector<8xi32>
    %41 = vector.shape_cast %40 : vector<8xi32> to vector<8x1xi32>
    %42 = arith.cmpi eq, %41, %26 : vector<8x1xi32>
    %43 = arith.extui %42 : vector<8x1xi1> to vector<8x1xi32>
    %44 = arith.sitofp %43 : vector<8x1xi32> to vector<8x1xf32>
    %45 = tpu.iota {dimensions = array<i32: 1>} : vector<8x2xi32>
    %c0_i32 = arith.constant 0 : i32
    %46 = vector.broadcast %c0_i32 : i32 to vector<8x2xi32>
    %47 = arith.cmpi eq, %45, %46 : vector<8x2xi32>
    %48 = vector.shape_cast %35 : vector<8x1xf32> to vector<8x1xf32>
    %49 = vector.broadcast %48 : vector<8x1xf32> to vector<8x2xf32>
    %50 = vector.shape_cast %44 : vector<8x1xf32> to vector<8x1xf32>
    %51 = vector.broadcast %50 : vector<8x1xf32> to vector<8x2xf32>
    %52 = arith.select %47, %49, %51 : vector<8x2xi1>, vector<8x2xf32>
    %c0_21 = arith.constant 0 : index
    %c0_22 = arith.constant 0 : index
    %53 = vector.load %arg8[%c0_21, %c0_22] : memref<8x2xf32, #tpu.memory_space<vmem>>, vector<8x2xf32>
    tpu.vector_store %arg8[%c0_21, %c0_22], %52 {strides = array<i32>} : memref<8x2xf32, #tpu.memory_space<vmem>>, vector<8x2xf32>,
    return
  }
  func.func @transform_0(%arg0: i32) -> (i32, i32) {
    %c0_i32 = arith.constant 0 : i32
    %c0_i32_0 = arith.constant 0 : i32
    return %arg0, %c0_i32 : i32, i32
  }
  func.func @transform_1(%arg0: i32) -> (i32, i32) {
    %c0_i32 = arith.constant 0 : i32
    %c0_i32_0 = arith.constant 0 : i32
    return %arg0, %c0_i32 : i32, i32
  }
  func.func @transform_2(%arg0: i32) -> (i32, i32) {
    %c0_i32 = arith.constant 0 : i32
    %c0_i32_0 = arith.constant 0 : i32
    %c0_i32_1 = arith.constant 0 : i32
    return %c0_i32, %c0_i32_0 : i32, i32
  }
  func.func @transform_3(%arg0: i32) -> (i32, i32) {
    %c0_i32 = arith.constant 0 : i32
    %c0_i32_0 = arith.constant 0 : i32
    %c0_i32_1 = arith.constant 0 : i32
    return %c0_i32, %c0_i32_0 : i32, i32
  }
  func.func @transform_4(%arg0: i32) -> (i32, i32) {
    %c0_i32 = arith.constant 0 : i32
    %c0_i32_0 = arith.constant 0 : i32
    %c0_i32_1 = arith.constant 0 : i32
    return %c0_i32, %c0_i32_0 : i32, i32
  }
  func.func @transform_5(%arg0: i32) -> (i32, i32) {
    %c0_i32 = arith.constant 0 : i32
    %c0_i32_0 = arith.constant 0 : i32
    %c0_i32_1 = arith.constant 0 : i32
    return %c0_i32, %c0_i32_0 : i32, i32
  }
  func.func @transform_6(%arg0: i32) -> (i32, i32) {
    %c0_i32 = arith.constant 0 : i32
    %c0_i32_0 = arith.constant 0 : i32
    return %arg0, %c0_i32 : i32, i32
  }
  func.func @transform_7(%arg0: i32) -> (i32, i32) {
    %c0_i32 = arith.constant 0 : i32
    %c0_i32_0 = arith.constant 0 : i32
    return %arg0, %c0_i32 : i32, i32
  }
}

</mosaic_0001>

<llo_original>
// kernel: tpu_custom_call.1
$region0: #{tpu_custom_call.1}
  #allocation0 [shape = 'u32[]', space=smem, size = 0x4, offset = 0x4, fixed_abs, tag = 'smem constant byte address 0x4 - core index']
  #allocation1 [shape = 'u32[72,128]{1,0:T(1,128)}', space=vmem, size = 0x9000, scoped, tag = 'internal scratch']
  %s0 = inlined_call_operand.vmem [shape: bf16[8,32], index: 0, kind: input, shape index: {}]
  %s1 = inlined_call_operand.vmem [shape: s32[8,1], index: 1, kind: input, shape index: {}]
  %s2 = inlined_call_operand.hbm [shape: bf16[32,32], index: 2, kind: input, shape index: {}]
  %s3 = inlined_call_operand.vmem [shape: f32[1,32], index: 3, kind: input, shape index: {}]
  %s4 = inlined_call_operand.hbm [shape: bf16[32,128], index: 4, kind: input, shape index: {}]
  %s5 = inlined_call_operand.vmem [shape: f32[1,128], index: 5, kind: input, shape index: {}]
  %s6 = inlined_call_operand.hbm [shape: bf16[8,128], index: 6, kind: output, shape index: {0}]
  %s7 = inlined_call_operand.vmem [shape: f32[8,2], index: 7, kind: output, shape index: {1}]
  %8 = xla_tuple %s6, %s7
  %s9 = sld [smem:[#allocation0]]
  $region50: #{tpu_custom_call.1} parent=0
    _
  %s11 = ssub.s32 1, %s9
  %s12 = scalar_select 0, %s11, %s9
  $region1: #{tpu_custom_call.1} parent=0
    #allocation2 [shape = 'u8[8192]{0}', space=vmem, size = 0x2000, scoped, tag = 'input window, operand 2, single buffered']
    #allocation3 [shape = 's32[1]{0}', space=sflag, size = 0x4, scoped, tag = 'scoped memory for tpu_custom_call.1']
    #allocation4 [shape = 's32[1]{0}', space=sflag, size = 0x4, scoped, tag = 'scoped memory for tpu_custom_call.1']
    #allocation5 [shape = 'u8[8192]{0}', space=vmem, size = 0x2000, scoped, tag = 'input window, operand 4, single buffered']
    #allocation6 [shape = 's32[1]{0}', space=sflag, size = 0x4, scoped, tag = 'scoped memory for tpu_custom_call.1']
    #allocation7 [shape = 'u8[2048]{0}', space=vmem, size = 0x800, scoped, tag = 'output window, operand 0, single buffered']
    %13 = vsyncpa [#allocation3], 0
    %14 = vsyncpa [#allocation6], 0
    %15 = vsyncpa [#allocation4], 0
    // Predicated region
    $region2: #{tpu_custom_call.1} parent=1 // pred_check
      _
    $region3: #{tpu_custom_call.1} parent=1 // pred_check_branch
      %17 = sbr.rel (0) target = $region5
    $region4: #{tpu_custom_call.1} parent=1 // pred_region
      _
    $region5: #{tpu_custom_call.1} parent=1 // pred_fallthru
      _
    // Predicated region
    $region6: #{tpu_custom_call.1} parent=1 // pred_check
      _
    $region7: #{tpu_custom_call.1} parent=1 // pred_check_branch
      %19 = sbr.rel (0) target = $region9
    $region8: #{tpu_custom_call.1} parent=1 // pred_region
      _
    $region9: #{tpu_custom_call.1} parent=1 // pred_fallthru
      _
    // Predicated region
    $region10: #{tpu_custom_call.1} parent=1 // pred_check
      _
    $region11: #{tpu_custom_call.1} parent=1 // pred_check_branch
      %21 = sbr.rel (0) target = $region13
    $region12: #{tpu_custom_call.1} parent=1 // pred_region
      %23 = vsyncadd [#allocation3], 0
      %s24 = sshll.u32 %s2, 4
      %s25 = int_to_ptr.hbm [resolvable:$true] %s24
      %s26 = sshll.u32 [#allocation2], 4
      %s27 = int_to_ptr.vmem [resolvable:$true] %s26
      %32 = dma.hbm_to_vmem [thread:$0]  %s25, 256, %s27, [#allocation3], 64, 64, 4
    $region13: #{tpu_custom_call.1} parent=1 // pred_fallthru
      _
    // Predicated region
    $region14: #{tpu_custom_call.1} parent=1 // pred_check
      _
    $region15: #{tpu_custom_call.1} parent=1 // pred_check_branch
      %34 = sbr.rel (0) target = $region17
    $region16: #{tpu_custom_call.1} parent=1 // pred_region
      _
    $region17: #{tpu_custom_call.1} parent=1 // pred_fallthru
      _
    // Predicated region
    $region18: #{tpu_custom_call.1} parent=1 // pred_check
      _
    $region19: #{tpu_custom_call.1} parent=1 // pred_check_branch
      %36 = sbr.rel (0) target = $region21
    $region20: #{tpu_custom_call.1} parent=1 // pred_region
      %38 = vsyncadd [#allocation6], 0
      %s39 = sshll.u32 %s4, 4
      %s40 = int_to_ptr.hbm [resolvable:$true] %s39
      %s41 = sshll.u32 [#allocation5], 4
      %s42 = int_to_ptr.vmem [resolvable:$true] %s41
      %47 = dma.hbm_to_vmem [thread:$0]  %s40, 256, %s42, [#allocation6], 64, 64, 4
    $region21: #{tpu_custom_call.1} parent=1 // pred_fallthru
      _
    // Predicated region
    $region22: #{tpu_custom_call.1} parent=1 // pred_check
      _
    $region23: #{tpu_custom_call.1} parent=1 // pred_check_branch
      %49 = sbr.rel (0) target = $region25
    $region24: #{tpu_custom_call.1} parent=1 // pred_region
      _
    $region25: #{tpu_custom_call.1} parent=1 // pred_fallthru
      _
    // Predicated region
    $region26: #{tpu_custom_call.1} parent=1 // pred_check
      _
    $region27: #{tpu_custom_call.1} parent=1 // pred_check_branch
      %51 = sbr.rel (0) target = $region29
    $region28: #{tpu_custom_call.1} parent=1 // pred_region
      %53 = dma.done [#allocation3], 256
    $region29: #{tpu_custom_call.1} parent=1 // pred_fallthru
      _
    // Predicated region
    $region30: #{tpu_custom_call.1} parent=1 // pred_check
      _
    $region31: #{tpu_custom_call.1} parent=1 // pred_check_branch
      %55 = sbr.rel (0) target = $region33
    $region32: #{tpu_custom_call.1} parent=1 // pred_region
      %57 = dma.done [#allocation6], 256
    $region33: #{tpu_custom_call.1} parent=1 // pred_fallthru
      _
    %v59 = vld [vmem:[%s0] sm:$0xf]
    %v60 = vld [vmem:[#allocation2] sm:$0xf]
    %v61 = vld [vmem:[#allocation2 + $0x4] sm:$0xf]
    %v62 = vld [vmem:[#allocation2 + $0x8] sm:$0xf]
    %v63 = vld [vmem:[#allocation2 + $0xc] sm:$0xf]
    %v64 = vld [vmem:[%s3] sm:$0x1]
    %v66 = vperm.slane %v64, 0
    %v72 = vunpack.c.l.b16 %v60
    %v73 = vunpack.c.l.b16 %v61
    %v74 = vunpack.c.l.b16 %v62
    %v75 = vunpack.c.l.b16 %v63
    %v76 = vpack.c.b16 %v73, %v72
    %v77 = vpack.c.b16 %v75, %v74
    %vm80 = vcmask 261120
    %v82 = vsel %vm80, %v59, 0
    %84 = vmatpush.bf16.msra.mxu0 0
    %85 = vmatpush.bf16.msra.mxu0 0
    %86 = vmatpush.bf16.msra.mxu0 0
    %87 = vmatpush.bf16.msra.mxu0 0
    %88 = vmatpush.bf16.msra.mxu0 0
    %89 = vmatpush.bf16.msra.mxu0 0
    %90 = vmatpush.bf16.msra.mxu0 %v77
    %91 = vmatpush.bf16.msra.mxu0 %v76
    %92 = vmatmul.bf16.gmra.mxu0 %v82
    %v93 = vpop.f32.mrf.mxu0
    %v94 = vadd.f32 %v66, %v93
    %v95 = vpop.f32.mrf.mxu0
    %96 = vdwg.mxu0
    %v97 = vmax.f32 %v94, 0.0
    %v98 = vpack.c.bf16 %v97, %v97
    %v99 = vld [vmem:[#allocation5] sm:$0xf]
    %v100 = vld [vmem:[#allocation5 + $0x4] sm:$0xf]
    %v101 = vld [vmem:[#allocation5 + $0x8] sm:$0xf]
    %v102 = vld [vmem:[#allocation5 + $0xc] sm:$0xf]
    %v103 = vld [vmem:[%s5] sm:$0x1]
    %v105 = vperm.slane %v103, 0
    %v111 = vunpack.c.l.b16 %v99
    %v112 = vunpack.c.l.b16 %v100
    %v113 = vunpack.c.l.b16 %v101
    %v114 = vunpack.c.l.b16 %v102
    %v115 = vpack.c.b16 %v112, %v111
    %v116 = vpack.c.b16 %v114, %v113
    %v120 = vsel %vm80, %v98, 0
    %122 = vmatpush.bf16.msra.mxu0 0
    %123 = vmatpush.bf16.msra.mxu0 0
    %124 = vmatpush.bf16.msra.mxu0 0
    %125 = vmatpush.bf16.msra.mxu0 0
    %126 = vmatpush.bf16.msra.mxu0 0
    %127 = vmatpush.bf16.msra.mxu0 0
    %128 = vmatpush.bf16.msra.mxu0 %v116
    %129 = vmatpush.bf16.msra.mxu0 %v115
    %130 = vmatmul.bf16.gmra.mxu0 %v120
    %v131 = vpop.f32.mrf.mxu0
    %v132 = vadd.f32 %v105, %v131
    %v133 = vpop.f32.mrf.mxu0
    %134 = vdwg.mxu0
    %135 = vmax.xlane.f32.xlu0 %v132
    %v136 = vpop.xlane.xlu0 %135
    %v137 = vsub.f32 %v132, %v136
    %v138 = vmul.f32 %v137, 1.442695
    %v139 = vpow.pop %v138
    %140 = vadd.xlane.f32.xlu0 %v139
    %v141 = vpop.xlane.xlu0 %140
    %v142 = vlog2.pop %v141
    %v143 = vmul.f32 %v142, 0.6931472
    %v144 = vsub.f32 %v137, %v143
    %v145 = vpack.c.bf16 %v144, %v144
    %146 = vst [vmem:[#allocation7] sm:$0xf] %v145
    %v147 = vld [vmem:[%s1] sm:$0xff]
    %v148 = vlaneseq
    %v149 = vand.u32 %v148, 127
    %150 = vset.pattern.permute.xlu0 0
    %151 = vperm.xlu0 %150, %v147
    %v152 = vpop.permute.xlu0 %151
    %vm153 = vcmp.eq.s32.totalorder %v149, %v152
    %v154 = vsel %vm153, %v144, 0.0
    %155 = vadd.xlane.f32.xlu0 %v154
    %v156 = vpop.xlane.xlu0 %155
    %v157 = vsub.f32 0.0, %v156
    %vm158 = vcmp.eq.f32.partialorder %v132, %v136
    %v159 = vsel %vm158, %v149, 128
    %v160 = vand.u32 %v159, 65535
    %v161 = vshra.s32 %v159, 16
    %v162 = vcvt.s32.f32 %v160
    %v163 = vcvt.s32.f32 %v161
    %164 = vmin.xlane.f32.xlu0 %v163
    %v165 = vpop.xlane.xlu0 %164
    %vm166 = vcmp.eq.f32.partialorder %v163, %v165
    %v167 = vsel %vm166, %v162, inf
    %168 = vmin.xlane.f32.xlu0 %v167
    %v169 = vpop.xlane.xlu0 %168
    %v170 = vcvt.f32.s32 %v169
    %v171 = vcvt.f32.s32 %v165
    %v172 = vshll.u32 %v171, 16
    %v173 = vadd.s32 %v172, %v170
    %vm174 = vcmp.eq.s32.totalorder %v173, %v147
    %v175 = vsel %vm174, 1, 0
    %v176 = vcvt.s32.f32 %v175
    %vm177 = vcmp.eq.s32.totalorder %v149, 0
    %179 = vset.pattern.permute.xlu0 0
    %180 = vperm.xlu0 %179, %v176
    %v181 = vpop.permute.xlu0 %180
    %v183 = vsel %vm177, %v157, %v181
    %vm184 = vcmask 15360
    %185 = vst.msk [vmem:[%s7] sm:$0xff] %vm184, %v183
    // Predicated region
    $region34: #{tpu_custom_call.1} parent=1 // pred_check
      _
    $region35: #{tpu_custom_call.1} parent=1 // pred_check_branch
      %187 = sbr.rel (0) target = $region37
    $region36: #{tpu_custom_call.1} parent=1 // pred_region
      %189 = vsyncadd [#allocation4], 0
      %s191 = sshll.u32 [#allocation7], 4
      %s192 = int_to_ptr.vmem [resolvable:$true] %s191
      %s193 = sshll.u32 %s6, 4
      %s194 = int_to_ptr.hbm [resolvable:$true] %s193
      %196 = dma.vmem_to_hbm [thread:$0]  %s192, 64, %s194, [#allocation4]
    $region37: #{tpu_custom_call.1} parent=1 // pred_fallthru
      _
    // Predicated region
    $region38: #{tpu_custom_call.1} parent=1 // pred_check
      _
    $region39: #{tpu_custom_call.1} parent=1 // pred_check_branch
      %198 = sbr.rel (0) target = $region41
    $region40: #{tpu_custom_call.1} parent=1 // pred_region
      _
    $region41: #{tpu_custom_call.1} parent=1 // pred_fallthru
      _
    // Predicated region
    $region42: #{tpu_custom_call.1} parent=1 // pred_check
      _
    $region43: #{tpu_custom_call.1} parent=1 // pred_check_branch
      %200 = sbr.rel (0) target = $region45
    $region44: #{tpu_custom_call.1} parent=1 // pred_region
      %202 = dma.done [#allocation4], 64
    $region45: #{tpu_custom_call.1} parent=1 // pred_fallthru
      _
    // Predicated region
    $region46: #{tpu_custom_call.1} parent=1 // pred_check
      _
    $region47: #{tpu_custom_call.1} parent=1 // pred_check_branch
      %204 = sbr.rel (0) target = $region49
    $region48: #{tpu_custom_call.1} parent=1 // pred_region
      _
    $region49: #{tpu_custom_call.1} parent=1 // pred_fallthru
      _
    %205 = vsyncpa [#allocation3], 1
    %206 = vsyncpa [#allocation6], 1
    %207 = vsyncpa [#allocation4], 1

</llo_original>
